<compile_context>
chip_gen: v7x
topology: tpu7x:2x2x1
jax: 0.10.0
libtpu: 0.0.40
codegen_flags: <defaults>
</compile_context>

<pallas_src>
import functools
import math

import jax
import jax.numpy as jnp
from jax.experimental import pallas as pl
from jax.experimental.pallas import tpu as pltpu

_LANE_CANDIDATES = (4096, 2048, 1024, 512, 256, 128)
_TARGET_BLOCK_BYTES = 2 * 1024 * 1024  # ~2 MiB of input per grid step


def _round_up(v, m):
    return ((v + m - 1) // m) * m


def _hswish_f32(x):
    # x * hardtanh(x+3, 0, 6) * (1/6)  -- multiply, not divide
    return x * (jnp.clip(x + 3.0, 0.0, 6.0) * (1.0 / 6.0))


# ------------------------------ kernels -------------------------------------
def _hswish_kernel(x_ref, o_ref):
    x = x_ref[...].astype(jnp.float32)
    o_ref[...] = _hswish_f32(x).astype(o_ref.dtype)


def _hswish_quant_kernel(params_ref, x_ref, o_ref, *, act_func):
    # params (SMEM, f32): [inv_a, n_lvs - 1, c / (n_lvs - 1)]
    x = x_ref[...].astype(jnp.float32)
    if act_func:
        x = _hswish_f32(x)
    inv_a = params_ref[0]
    nm1 = params_ref[1]
    post = params_ref[2]
    y = jnp.clip((x + 0.375) * inv_a, 0.0, 1.0)
    o_ref[...] = (jnp.round(y * nm1) * post - 0.375).astype(o_ref.dtype)


# ------------------------------ wrapper --------------------------------------
def _choose_width(total, row_align):
    """Pick a lane-dense width W (multiple of 128). Prefer layouts where the
    row count is a multiple of the native sublane tiling so no pad is needed."""
    for w in _LANE_CANDIDATES:
        if total % (w * row_align) == 0:
            return w, 0
    for w in _LANE_CANDIDATES:
        if total % w == 0:
            return w, 0
    # Rare fallback (total not a multiple of 128): minimal zero-pad.
    w = 128
    pad = (-total) % (w * row_align)
    return w, pad


def q_hswish_forward(x, a_param, c_param, n_lvs=1, bits=(32,), act_func=True):
    """Pallas implementation of Q_HSwish.forward (dtype-preserving)."""
    orig_shape = x.shape
    orig_dtype = x.dtype
    quantize = not (len(bits) == 1 and bits[0] == 32)

    if not quantize and not act_func:
        return x  # identity in this configuration

    total = int(x.size)
    itemsize = jnp.dtype(orig_dtype).itemsize
    row_align = max(8, 32 // itemsize)  # 8 for f32, 16 for bf16, 32 for int8

    W, pad = _choose_width(total, row_align)
    flat = x.reshape(-1)
    if pad:
        flat = jnp.concatenate([flat, jnp.zeros((pad,), orig_dtype)])
    M = (total + pad) // W
    slab = flat.reshape(M, W)

    # ~2 MiB of input per block, rows a multiple of the native sublane tile.
    tile_rows = max(row_align,
                    (_TARGET_BLOCK_BYTES // (W * itemsize)) // row_align * row_align)
    if M <= tile_rows:
        tile_rows = M  # single block == full array dims (always a legal block)
    grid = (pl.cdiv(M, tile_rows),)

    block_spec = pl.BlockSpec((tile_rows, W), lambda i: (i, 0))
    out_shape = jax.ShapeDtypeStruct((M, W), orig_dtype)
    cparams = pltpu.CompilerParams(dimension_semantics=("parallel",))

    if not quantize:
        out = pl.pallas_call(
            _hswish_kernel,
            out_shape=out_shape,
            grid=grid,
            in_specs=[block_spec],
            out_specs=block_spec,
            compiler_params=cparams,
        )(slab)
    else:
        # Scalar prework done once, outside the kernel, with traceable jnp ops
        # (works when a_param / c_param are learnable jnp arrays under jit/grad).
        a = jax.nn.softplus(jnp.asarray(a_param, jnp.float32).reshape(()))
        c = jax.nn.softplus(jnp.asarray(c_param, jnp.float32).reshape(()))
        nm1 = jnp.asarray(n_lvs, jnp.float32).reshape(()) - 1.0
        # NOTE: n_lvs == 1 on the quant path gives inf/NaN, same as PyTorch.
        params = jnp.stack([1.0 / a, nm1, c / nm1])
        kernel = functools.partial(_hswish_quant_kernel, act_func=act_func)
        out = pl.pallas_call(
            kernel,
            out_shape=out_shape,
            grid=grid,
            in_specs=[pl.BlockSpec(memory_space=pltpu.MemorySpace.SMEM), block_spec],
            out_specs=block_spec,
            compiler_params=cparams,
        )(params, slab)

    if pad:
        return out.reshape(-1)[:total].reshape(orig_shape)
    return out.reshape(orig_shape)


# ------------------------- pure-JAX reference --------------------------------
def q_hswish_reference(x, a_param, c_param, n_lvs=1, bits=(32,), act_func=True):
    """Reference matching the PyTorch forward.  Divides are reassociated into
    multiplies by precomputed reciprocals (identical math to the kernel; this
    differs from the literal torch expression by at most 1 ulp per element)."""
    orig_dtype = x.dtype
    xf = x.astype(jnp.float32)
    if act_func:
        xf = _hswish_f32(xf)
    if len(bits) == 1 and bits[0] == 32:
        return xf.astype(orig_dtype) if act_func else x
    a = jax.nn.softplus(jnp.asarray(a_param, jnp.float32).reshape(()))
    c = jax.nn.softplus(jnp.asarray(c_param, jnp.float32).reshape(()))
    nm1 = jnp.asarray(n_lvs, jnp.float32).reshape(()) - 1.0
    y = jnp.clip((xf + 0.375) * (1.0 / a), 0.0, 1.0)
    y = jnp.round(y * nm1) * (c / nm1) - 0.375
    return y.astype(orig_dtype)


if __name__ == "__main__":
    key = jax.random.PRNGKey(0)
    x = jax.random.normal(key, (2, 4, 16, 16), dtype=jnp.float32) * 3.0

    # ---- Default module config: bits=[32], n_lvs=[1], act_func=True --------
    a_param = 0.1
    c_param = 0.1
    out = q_hswish_forward(x, a_param, c_param, n_lvs=1, bits=(32,), act_func=True)
    out = jax.block_until_ready(out)
    ref = q_hswish_reference(x, a_param, c_param, n_lvs=1, bits=(32,), act_func=True)
    assert out.shape == x.shape and out.dtype == x.dtype
    assert float(jnp.max(jnp.abs(out - ref))) < 1e-5

    # ---- After .initialize(n_lvs=16, offset=1.0, diff=0.5): quant path -----
    offset, diff = 1.0, 0.5
    a_init = math.log(math.exp(offset + diff) - 1.0)
    c_init = a_init
    n_lvs, bits = 16, (4,)
    out_q = q_hswish_forward(x, a_init, c_init, n_lvs=n_lvs, bits=bits, act_func=True)
    out_q = jax.block_until_ready(out_q)
    ref_q = q_hswish_reference(x, a_init, c_init, n_lvs=n_lvs, bits=bits, act_func=True)
    assert out_q.shape == x.shape and out_q.dtype == x.dtype
    assert float(jnp.max(jnp.abs(out_q - ref_q))) < 1e-5

    # ---- Quant path with traced (learnable) a/c under jit ------------------
    jitted = jax.jit(
        lambda xx, aa, cc: q_hswish_forward(
            xx, aa, cc, n_lvs=n_lvs, bits=bits, act_func=True))
    out_j = jax.block_until_ready(
        jitted(x, jnp.float32(a_init), jnp.float32(c_init)))
    assert float(jnp.max(jnp.abs(out_j - ref_q))) < 1e-5

    # ---- bf16 input: dtype-preserving HBM I/O, f32 math in-kernel -----------
    xb = x.astype(jnp.bfloat16)
    out_b = jax.block_until_ready(
        q_hswish_forward(xb, a_param, c_param, n_lvs=1, bits=(32,), act_func=True))
    ref_b = q_hswish_reference(xb, a_param, c_param, n_lvs=1, bits=(32,), act_func=True)
    assert out_b.dtype == jnp.bfloat16
    assert float(jnp.max(jnp.abs(out_b.astype(jnp.float32)
                                 - ref_b.astype(jnp.float32)))) < 1e-5

    print("KERNEL_OK")
</pallas_src>

<mosaic_0001>
module attributes {stable_mosaic.version = 11 : i64} {
  func.func @_hswish_kernel(%arg0: i32, %arg1: memref<8x256xf32, #tpu.memory_space<vmem>>, %arg2: memref<8x256xf32, #tpu.memory_space<vmem>>) attributes {dimension_semantics = [#tpu.dimension_semantics<parallel>], iteration_bounds = array<i64: 1>, scalar_prefetch = 0 : i64, scratch_operands = 0 : i64, tpu.core_type = #tpu.core_type<tc>, window_params = [{transform_indices = @transform_0, window_bounds = array<i64: 8, 256>}, {transform_indices = @transform_1, window_bounds = array<i64: 8, 256>}]} {
    %c0 = arith.constant 0 : index
    %c0_0 = arith.constant 0 : index
    %0 = vector.load %arg1[%c0, %c0_0] : memref<8x256xf32, #tpu.memory_space<vmem>>, vector<8x256xf32>
    %cst = arith.constant 3.000000e+00 : f32
    %1 = vector.broadcast %cst : f32 to vector<8x256xf32>
    %2 = arith.addf %0, %1 : vector<8x256xf32>
    %cst_1 = arith.constant 0.000000e+00 : f32
    %cst_2 = arith.constant 6.000000e+00 : f32
    %3 = vector.broadcast %cst_1 : f32 to vector<8x256xf32>
    %4 = arith.maximumf %3, %2 : vector<8x256xf32>
    %5 = vector.broadcast %cst_2 : f32 to vector<8x256xf32>
    %6 = arith.minimumf %5, %4 : vector<8x256xf32>
    %cst_3 = arith.constant 0.166666672 : f32
    %7 = vector.broadcast %cst_3 : f32 to vector<8x256xf32>
    %8 = arith.mulf %6, %7 : vector<8x256xf32>
    %9 = arith.mulf %0, %8 : vector<8x256xf32>
    %c0_4 = arith.constant 0 : index
    %c0_5 = arith.constant 0 : index
    %10 = vector.load %arg2[%c0_4, %c0_5] : memref<8x256xf32, #tpu.memory_space<vmem>>, vector<8x256xf32>
    tpu.vector_store %arg2[%c0_4, %c0_5], %9 {strides = array<i32>} : memref<8x256xf32, #tpu.memory_space<vmem>>, vector<8x256xf32>,
    return
  }
  func.func @transform_0(%arg0: i32) -> (i32, i32) {
    %c0_i32 = arith.constant 0 : i32
    %c0_i32_0 = arith.constant 0 : i32
    return %arg0, %c0_i32 : i32, i32
  }
  func.func @transform_1(%arg0: i32) -> (i32, i32) {
    %c0_i32 = arith.constant 0 : i32
    %c0_i32_0 = arith.constant 0 : i32
    return %arg0, %c0_i32 : i32, i32
  }
}

</mosaic_0001>

<llo_original>
// kernel: tpu_custom_call.1
$region0: #{tpu_custom_call.1}
  #allocation0 [shape = 'u32[]', space=smem, size = 0x4, offset = 0x4, fixed_abs, tag = 'smem constant byte address 0x4 - core index']
  #allocation1 [shape = 'u32[144,128]{1,0:T(1,128)}', space=vmem, size = 0x12000, scoped, tag = 'internal scratch']
  %s0 = inlined_call_operand.hbm [shape: f32[8,256], index: 0, kind: input, shape index: {}]
  %s1 = inlined_call_operand.hbm [shape: f32[8,256], index: 1, kind: output, shape index: {}]
  %s2 = sld [smem:[#allocation0]]
  $region18: #{tpu_custom_call.1} parent=0
    _
  %s4 = ssub.s32 1, %s2
  %s5 = scalar_select 0, %s4, %s2
  $region1: #{tpu_custom_call.1} parent=0
    #allocation2 [shape = 'u8[8192]{0}', space=vmem, size = 0x2000, scoped, tag = 'input window, operand 0, single buffered']
    #allocation3 [shape = 's32[1]{0}', space=sflag, size = 0x4, scoped, tag = 'scoped memory for tpu_custom_call.1']
    #allocation4 [shape = 's32[1]{0}', space=sflag, size = 0x4, scoped, tag = 'scoped memory for tpu_custom_call.1']
    #allocation5 [shape = 'u8[8192]{0}', space=vmem, size = 0x2000, scoped, tag = 'output window, operand 0, single buffered']
    %6 = vsyncpa [#allocation3], 0
    %7 = vsyncpa [#allocation4], 0
    // Predicated region
    $region2: #{tpu_custom_call.1} parent=1 // pred_check
      _
    $region3: #{tpu_custom_call.1} parent=1 // pred_check_branch
      %9 = sbr.rel (0) target = $region5
    $region4: #{tpu_custom_call.1} parent=1 // pred_region
      %s11 = ssub.s32 256, 256
      %12 = vsyncadd [#allocation3], %s11
      %s14 = sshll.u32 [#allocation2], 4
      %s15 = int_to_ptr.vmem [resolvable:$true] %s14
      %17 = dma.hbm_to_vmem [thread:$0]  %s0, 256, %s15, [#allocation3]
    $region5: #{tpu_custom_call.1} parent=1 // pred_fallthru
      _
    // Predicated region
    $region6: #{tpu_custom_call.1} parent=1 // pred_check
      _
    $region7: #{tpu_custom_call.1} parent=1 // pred_check_branch
      %19 = sbr.rel (0) target = $region9
    $region8: #{tpu_custom_call.1} parent=1 // pred_region
      %20 = dma.done [#allocation3], 256
    $region9: #{tpu_custom_call.1} parent=1 // pred_fallthru
      _
    %v21 = vld [vmem:[#allocation2] sm:$0xff]
    %v22 = vld [vmem:[#allocation2 + $0x8] sm:$0xff]
    %v23 = vadd.f32 %v21, 3.0
    %v24 = vadd.f32 %v22, 3.0
    %v25 = vmax.f32 %v23, 0.0
    %v26 = vmax.f32 %v24, 0.0
    %v27 = vmin.f32 %v25, 6.0
    %v28 = vmin.f32 %v26, 6.0
    %v29 = vmul.f32 %v27, 0.16666667
    %v30 = vmul.f32 %v28, 0.16666667
    %v31 = vmul.f32 %v21, %v29
    %v32 = vmul.f32 %v22, %v30
    %33 = vst [vmem:[#allocation5] sm:$0xff] %v31
    %34 = vst [vmem:[#allocation5 + $0x8] sm:$0xff] %v32
    // Predicated region
    $region10: #{tpu_custom_call.1} parent=1 // pred_check
      _
    $region11: #{tpu_custom_call.1} parent=1 // pred_check_branch
      %36 = sbr.rel (0) target = $region13
    $region12: #{tpu_custom_call.1} parent=1 // pred_region
      %s38 = ssub.s32 256, 256
      %39 = vsyncadd [#allocation4], %s38
      %s41 = sshll.u32 [#allocation5], 4
      %s42 = int_to_ptr.vmem [resolvable:$true] %s41
      %44 = dma.vmem_to_hbm [thread:$0]  %s42, 256, %s1, [#allocation4]
    $region13: #{tpu_custom_call.1} parent=1 // pred_fallthru
      _
    // Predicated region
    $region14: #{tpu_custom_call.1} parent=1 // pred_check
      _
    $region15: #{tpu_custom_call.1} parent=1 // pred_check_branch
      %46 = sbr.rel (0) target = $region17
    $region16: #{tpu_custom_call.1} parent=1 // pred_region
      %47 = dma.done [#allocation4], 256
    $region17: #{tpu_custom_call.1} parent=1 // pred_fallthru
      _
    %48 = vsyncpa [#allocation3], 1
    %49 = vsyncpa [#allocation4], 1

</llo_original>
